<compile_context>
chip_gen: v6e
topology: v6e:2x2x1
jax: 0.10.0
libtpu: 0.0.40
codegen_flags: <defaults>
</compile_context>

<pallas_src>
import functools

import jax
import jax.numpy as jnp
from jax import lax
from jax.experimental import pallas as pl
from jax.experimental.pallas import tpu as pltpu

TEMPERATURE = 1.0
EPS = 1e-12              # torch.nn.functional.normalize default eps
_EPS_SQ = EPS * EPS


def _kernel_single(x_ref, w_ref, xinv_ref, winv_ref, o_ref):
    """Single pass over the feature axis: one MXU matmul + rank-1 scale."""
    out = lax.dot_general(
        x_ref[...], w_ref[...],
        dimension_numbers=(((1,), (1,)), ((), ())),   # contract last axis of both (no .T)
        preferred_element_type=jnp.float32)
    o_ref[...] = (out * xinv_ref[...] * winv_ref[...]).astype(o_ref.dtype)


def _kernel_multi(x_ref, w_ref, xinv_ref, winv_ref, o_ref, acc_ref):
    """Feature axis tiled (grid axis 2, last): f32 accumulator, init/finalize via pl.when."""
    k = pl.program_id(2)

    @pl.when(k == 0)
    def _():
        acc_ref[...] = jnp.zeros_like(acc_ref)

    acc_ref[...] += lax.dot_general(
        x_ref[...], w_ref[...],
        dimension_numbers=(((1,), (1,)), ((), ())),
        preferred_element_type=jnp.float32)

    @pl.when(k == pl.num_programs(2) - 1)
    def _():
        o_ref[...] = (acc_ref[...] * xinv_ref[...] * winv_ref[...]).astype(o_ref.dtype)


def _round_up(v, m):
    return ((v + m - 1) // m) * m


def pseudo_target_classifier_forward(x, weight, *, temperature=TEMPERATURE,
                                     mxu_dtype=None, out_dtype=jnp.float32,
                                     tm=512, tn=512, tk=2048):
    """x: [batch, num_features], weight: [base_class, num_features] -> [batch, base_class]."""
    B, F = x.shape
    C, F2 = weight.shape
    assert F == F2

    # Hoisted inverse norms (f32, from the original un-cast values).
    # rsqrt(max(sumsq, eps^2)) == 1 / max(||v||, eps)  -> exact torch F.normalize behaviour.
    x_inv = lax.rsqrt(jnp.maximum(jnp.sum(x.astype(jnp.float32) ** 2, axis=-1), _EPS_SQ))
    w_inv = lax.rsqrt(jnp.maximum(jnp.sum(weight.astype(jnp.float32) ** 2, axis=-1), _EPS_SQ))
    if temperature != 1.0:
        w_inv = w_inv * jnp.float32(1.0 / temperature)   # fold temperature into rank-1 scale

    # Optional bf16 MXU-operand path: cast in HBM (wrapper), never inside the kernel.
    if mxu_dtype is not None:
        x = x.astype(mxu_dtype)
        weight = weight.astype(mxu_dtype)
    in_bytes = jnp.dtype(x.dtype).itemsize
    out_bytes = jnp.dtype(out_dtype).itemsize

    # --- tile selection ---
    tm = min(tm, _round_up(B, 8))
    tn = min(tn, _round_up(C, 128))

    # Megacore occupancy: if both parallel axes would collapse to a single block,
    # halve tn (when large enough) so the grid has >= 2 parallel blocks.
    if (_round_up(B, tm) // tm) < 2 and (_round_up(C, tn) // tn) < 2 and tn >= 256:
        tn = _round_up((tn + 1) // 2, 128)

    Fp128 = _round_up(F, 128)
    single_pass = Fp128 <= tk
    tk = Fp128 if single_pass else tk

    Bp, Cp, Fp = _round_up(B, tm), _round_up(C, tn), _round_up(F, tk)

    # Zero-pad to aligned tiles (padded rows -> acc 0, padded cols -> w_inv 0).
    if (Bp, Fp) != (B, F):
        x = jnp.pad(x, ((0, Bp - B), (0, Fp - F)))
    if (Cp, Fp) != (C, F):
        weight = jnp.pad(weight, ((0, Cp - C), (0, Fp - F)))
    x_inv = jnp.pad(x_inv, (0, Bp - B)).reshape(Bp, 1)
    w_inv = jnp.pad(w_inv, (0, Cp - C)).reshape(1, Cp)

    # VMEM budget (double-buffered inputs/outputs + accumulator); explicit limit,
    # capped so it stays within v7x's 64 MiB physical VMEM.
    est = 2 * (tm * tk * in_bytes + tn * tk * in_bytes + tm * tn * out_bytes
               + tm * 4 + tn * 4)
    if not single_pass:
        est += tm * tn * 4
    vmem_limit = int(min(max(32 << 20, est + (8 << 20)), 48 << 20))

    cost = pl.CostEstimate(
        flops=2 * B * C * F,
        transcendentals=0,
        bytes_accessed=(B * F + C * F) * in_bytes + B * C * out_bytes)

    if single_pass:
        grid = (Bp // tm, Cp // tn)
        in_specs = [
            pl.BlockSpec((tm, tk), lambda i, j: (i, 0)),     # x tile
            pl.BlockSpec((tn, tk), lambda i, j: (j, 0)),     # W tile
            pl.BlockSpec((tm, 1), lambda i, j: (i, 0)),      # 1/||x_b|| column
            pl.BlockSpec((1, tn), lambda i, j: (0, j)),      # 1/||w_c|| row (incl. 1/T)
        ]
        out_spec = pl.BlockSpec((tm, tn), lambda i, j: (i, j))
        scratch = []
        kernel = _kernel_single
        dims = ("parallel", "parallel")
    else:
        grid = (Bp // tm, Cp // tn, Fp // tk)                # reduction axis last
        in_specs = [
            pl.BlockSpec((tm, tk), lambda i, j, k: (i, k)),
            pl.BlockSpec((tn, tk), lambda i, j, k: (j, k)),
            pl.BlockSpec((tm, 1), lambda i, j, k: (i, 0)),
            pl.BlockSpec((1, tn), lambda i, j, k: (0, j)),
        ]
        out_spec = pl.BlockSpec((tm, tn), lambda i, j, k: (i, j))
        scratch = [pltpu.VMEM((tm, tn), jnp.float32)]
        kernel = _kernel_multi
        dims = ("parallel", "parallel", "arbitrary")

    out = pl.pallas_call(
        kernel,
        out_shape=jax.ShapeDtypeStruct((Bp, Cp), out_dtype),
        grid_spec=pltpu.PrefetchScalarGridSpec(
            num_scalar_prefetch=0,
            grid=grid,
            in_specs=in_specs,
            out_specs=out_spec,
            scratch_shapes=scratch,
        ),
        compiler_params=pltpu.CompilerParams(
            dimension_semantics=dims,
            vmem_limit_bytes=vmem_limit,
        ),
        cost_estimate=cost,
    )(x, weight, x_inv, w_inv)

    if (Bp, Cp) != (B, C):
        out = out[:B, :C]
    return out


def _reference(x, weight, temperature=TEMPERATURE):
    xn = x / jnp.maximum(jnp.linalg.norm(x, axis=-1, keepdims=True), EPS)
    wn = weight / jnp.maximum(jnp.linalg.norm(weight, axis=-1, keepdims=True), EPS)
    return (xn @ wn.T) / temperature


if __name__ == "__main__":
    key = jax.random.PRNGKey(0)

    # ---- Case 1: small shapes consistent with the module (single-pass K path) ----
    batch, num_features, base_class = 4, 32, 8
    k_x, k_w, k_x2, k_w2 = jax.random.split(key, 4)
    x = jax.random.normal(k_x, (batch, num_features), dtype=jnp.float32)
    weight = jax.random.normal(k_w, (base_class, num_features), dtype=jnp.float32)

    out = jax.block_until_ready(pseudo_target_classifier_forward(x, weight))
    ref = _reference(x, weight)
    assert out.shape == (batch, base_class)
    assert jnp.allclose(out, ref, atol=1e-5, rtol=1e-5)

    # bf16 MXU-operand path (cast in the wrapper); looser tolerance.
    out_bf16 = jax.block_until_ready(
        pseudo_target_classifier_forward(x, weight, mxu_dtype=jnp.bfloat16))
    assert jnp.allclose(out_bf16, ref, atol=2e-2, rtol=2e-2)

    # ---- Case 2: exercises padding, megacore tn-split and the tiled-K (3-D grid) path ----
    b2, f2, c2 = 16, 256, 384
    x2 = jax.random.normal(k_x2, (b2, f2), dtype=jnp.float32)
    w2 = jax.random.normal(k_w2, (c2, f2), dtype=jnp.float32)
    out2 = jax.block_until_ready(
        pseudo_target_classifier_forward(x2, w2, tk=128))     # force multi-pass K
    ref2 = _reference(x2, w2)
    assert out2.shape == (b2, c2)
    assert jnp.allclose(out2, ref2, atol=1e-4, rtol=1e-4)

    print("KERNEL_OK")
</pallas_src>

<mosaic_0001>
module attributes {stable_mosaic.version = 11 : i64} {
  func.func @_kernel_single(%arg0: i32, %arg1: i32, %arg2: memref<8x128xf32, #tpu.memory_space<vmem>>, %arg3: memref<128x128xf32, #tpu.memory_space<vmem>>, %arg4: memref<8x1xf32, #tpu.memory_space<vmem>>, %arg5: memref<1x128xf32, #tpu.memory_space<vmem>>, %arg6: memref<8x128xf32, #tpu.memory_space<vmem>>) attributes {dimension_semantics = [#tpu.dimension_semantics<parallel>, #tpu.dimension_semantics<parallel>], iteration_bounds = array<i64: 1, 1>, scalar_prefetch = 0 : i64, scratch_operands = 0 : i64, tpu.core_type = #tpu.core_type<tc>, window_params = [{transform_indices = @transform_0, window_bounds = array<i64: 8, 128>}, {transform_indices = @transform_1, window_bounds = array<i64: 128, 128>}, {transform_indices = @transform_2, window_bounds = array<i64: 8, 1>}, {transform_indices = @transform_3, window_bounds = array<i64: 1, 128>}, {transform_indices = @transform_4, window_bounds = array<i64: 8, 128>}]} {
    %c0 = arith.constant 0 : index
    %c0_0 = arith.constant 0 : index
    %0 = vector.load %arg2[%c0, %c0_0] : memref<8x128xf32, #tpu.memory_space<vmem>>, vector<8x128xf32>
    %c0_1 = arith.constant 0 : index
    %c0_2 = arith.constant 0 : index
    %1 = vector.load %arg3[%c0_1, %c0_2] : memref<128x128xf32, #tpu.memory_space<vmem>>, vector<128x128xf32>
    %cst = arith.constant dense<0.000000e+00> : vector<8x128xf32>
    %2 = tpu.matmul %0, %1, %cst {dimension_numbers = #tpu.dot_dimension_numbers<[1], [1], [0], [0], [0, 0, 1, 0], [], []>} : vector<8x128xf32>, vector<128x128xf32>, vector<8x128xf32> -> vector<8x128xf32>
    %c0_3 = arith.constant 0 : index
    %c0_4 = arith.constant 0 : index
    %3 = vector.load %arg4[%c0_3, %c0_4] : memref<8x1xf32, #tpu.memory_space<vmem>>, vector<8x1xf32>
    %4 = vector.broadcast %3 : vector<8x1xf32> to vector<8x128xf32>
    %5 = arith.mulf %2, %4 : vector<8x128xf32>
    %c0_5 = arith.constant 0 : index
    %c0_6 = arith.constant 0 : index
    %6 = vector.load %arg5[%c0_5, %c0_6] : memref<1x128xf32, #tpu.memory_space<vmem>>, vector<1x128xf32>
    %7 = vector.broadcast %6 : vector<1x128xf32> to vector<8x128xf32>
    %8 = arith.mulf %5, %7 : vector<8x128xf32>
    %c0_7 = arith.constant 0 : index
    %c0_8 = arith.constant 0 : index
    %9 = vector.load %arg6[%c0_7, %c0_8] : memref<8x128xf32, #tpu.memory_space<vmem>>, vector<8x128xf32>
    tpu.vector_store %arg6[%c0_7, %c0_8], %8 {strides = array<i32>} : memref<8x128xf32, #tpu.memory_space<vmem>>, vector<8x128xf32>,
    return
  }
  func.func @transform_0(%arg0: i32, %arg1: i32) -> (i32, i32) {
    %c0_i32 = arith.constant 0 : i32
    %c0_i32_0 = arith.constant 0 : i32
    return %arg0, %c0_i32 : i32, i32
  }
  func.func @transform_1(%arg0: i32, %arg1: i32) -> (i32, i32) {
    %c0_i32 = arith.constant 0 : i32
    %c0_i32_0 = arith.constant 0 : i32
    return %arg1, %c0_i32 : i32, i32
  }
  func.func @transform_2(%arg0: i32, %arg1: i32) -> (i32, i32) {
    %c0_i32 = arith.constant 0 : i32
    %c0_i32_0 = arith.constant 0 : i32
    return %arg0, %c0_i32 : i32, i32
  }
  func.func @transform_3(%arg0: i32, %arg1: i32) -> (i32, i32) {
    %c0_i32 = arith.constant 0 : i32
    %c0_i32_0 = arith.constant 0 : i32
    return %c0_i32, %arg1 : i32, i32
  }
  func.func @transform_4(%arg0: i32, %arg1: i32) -> (i32, i32) {
    %c0_i32 = arith.constant 0 : i32
    return %arg0, %arg1 : i32, i32
  }
}

</mosaic_0001>

<llo_original>
// kernel: tpu_custom_call.1
$region0: #{tpu_custom_call.1}
  #allocation0 [shape = 'u32[]', space=smem, size = 0x4, offset = 0x4, fixed_abs, tag = 'smem constant byte address 0x4 - core index']
  #allocation1 [shape = 'u32[144,128]{1,0:T(1,128)}', space=vmem, size = 0x12000, scoped, tag = 'internal scratch']
  %s0 = inlined_call_operand.vmem [shape: f32[8,128], index: 0, kind: input, shape index: {}]
  %s1 = inlined_call_operand.hbm [shape: f32[128,128], index: 1, kind: input, shape index: {}]
  %s2 = inlined_call_operand.vmem [shape: f32[8,1], index: 2, kind: input, shape index: {}]
  %s3 = inlined_call_operand.vmem [shape: f32[1,128], index: 3, kind: input, shape index: {}]
  %s4 = inlined_call_operand.hbm [shape: f32[8,128], index: 4, kind: output, shape index: {}]
  %s5 = sld [smem:[#allocation0]]
  $region30: #{tpu_custom_call.1} parent=0
    _
  %s7 = ssub.s32 1, %s5
  %s8 = scalar_select 0, %s7, %s5
  $region1: #{tpu_custom_call.1} parent=0
    #allocation2 [shape = 'u8[65536]{0}', space=vmem, size = 0x10000, scoped, tag = 'input window, operand 1, single buffered']
    #allocation3 [shape = 's32[1]{0}', space=sflag, size = 0x4, scoped, tag = 'scoped memory for tpu_custom_call.1']
    #allocation4 [shape = 's32[1]{0}', space=sflag, size = 0x4, scoped, tag = 'scoped memory for tpu_custom_call.1']
    #allocation5 [shape = 'u8[4096]{0}', space=vmem, size = 0x1000, scoped, tag = 'output window, operand 0, single buffered']
    %9 = vsyncpa [#allocation3], 0
    %10 = vsyncpa [#allocation4], 0
    // Predicated region
    $region2: #{tpu_custom_call.1} parent=1 // pred_check
      _
    $region3: #{tpu_custom_call.1} parent=1 // pred_check_branch
      %12 = sbr.rel (0) target = $region5
    $region4: #{tpu_custom_call.1} parent=1 // pred_region
      _
    $region5: #{tpu_custom_call.1} parent=1 // pred_fallthru
      _
    // Predicated region
    $region6: #{tpu_custom_call.1} parent=1 // pred_check
      _
    $region7: #{tpu_custom_call.1} parent=1 // pred_check_branch
      %14 = sbr.rel (0) target = $region9
    $region8: #{tpu_custom_call.1} parent=1 // pred_region
      %s16 = ssub.s32 2048, 2048
      %17 = vsyncadd [#allocation3], %s16
      %s18 = sshll.u32 [#allocation2], 4
      %s19 = int_to_ptr.vmem [resolvable:$true] %s18
      %24 = dma.hbm_to_vmem [thread:$0]  %s1, 2048, %s19, [#allocation3], 128, 128, 8
    $region9: #{tpu_custom_call.1} parent=1 // pred_fallthru
      _
    // Predicated region
    $region10: #{tpu_custom_call.1} parent=1 // pred_check
      _
    $region11: #{tpu_custom_call.1} parent=1 // pred_check_branch
      %26 = sbr.rel (0) target = $region13
    $region12: #{tpu_custom_call.1} parent=1 // pred_region
      _
    $region13: #{tpu_custom_call.1} parent=1 // pred_fallthru
      _
    // Predicated region
    $region14: #{tpu_custom_call.1} parent=1 // pred_check
      _
    $region15: #{tpu_custom_call.1} parent=1 // pred_check_branch
      %28 = sbr.rel (0) target = $region17
    $region16: #{tpu_custom_call.1} parent=1 // pred_region
      _
    $region17: #{tpu_custom_call.1} parent=1 // pred_fallthru
      _
    // Predicated region
    $region18: #{tpu_custom_call.1} parent=1 // pred_check
      _
    $region19: #{tpu_custom_call.1} parent=1 // pred_check_branch
      %30 = sbr.rel (0) target = $region21
    $region20: #{tpu_custom_call.1} parent=1 // pred_region
      %31 = dma.done [#allocation3], 2048
    $region21: #{tpu_custom_call.1} parent=1 // pred_fallthru
      _
    %v32 = vld [vmem:[%s0] sm:$0xff]
    %v33 = vld [vmem:[#allocation2] sm:$0xff]
    %v34 = vld [vmem:[#allocation2 + $0x8] sm:$0xff]
    %v35 = vld [vmem:[#allocation2 + $0x10] sm:$0xff]
    %v36 = vld [vmem:[#allocation2 + $0x18] sm:$0xff]
    %v37 = vld [vmem:[#allocation2 + $0x20] sm:$0xff]
    %v38 = vld [vmem:[#allocation2 + $0x28] sm:$0xff]
    %v39 = vld [vmem:[#allocation2 + $0x30] sm:$0xff]
    %v40 = vld [vmem:[#allocation2 + $0x38] sm:$0xff]
    %v41 = vld [vmem:[#allocation2 + $0x40] sm:$0xff]
    %v42 = vld [vmem:[#allocation2 + $0x48] sm:$0xff]
    %v43 = vld [vmem:[#allocation2 + $0x50] sm:$0xff]
    %v44 = vld [vmem:[#allocation2 + $0x58] sm:$0xff]
    %v45 = vld [vmem:[#allocation2 + $0x60] sm:$0xff]
    %v46 = vld [vmem:[#allocation2 + $0x68] sm:$0xff]
    %v47 = vld [vmem:[#allocation2 + $0x70] sm:$0xff]
    %v48 = vld [vmem:[#allocation2 + $0x78] sm:$0xff]
    %49 = vmatprep.subr.mxu0 0.0
    %50 = vmatpush1.xpose.msra.mxu0 %v48
    %51 = vmatprep.subr.mxu0 0.0
    %52 = vmatpush1.xpose.msra.mxu0 %v47
    %53 = vmatprep.subr.mxu0 0.0
    %54 = vmatpush1.xpose.msra.mxu0 %v46
    %55 = vmatprep.subr.mxu0 0.0
    %56 = vmatpush1.xpose.msra.mxu0 %v45
    %57 = vmatprep.subr.mxu0 0.0
    %58 = vmatpush1.xpose.msra.mxu0 %v44
    %59 = vmatprep.subr.mxu0 0.0
    %60 = vmatpush1.xpose.msra.mxu0 %v43
    %61 = vmatprep.subr.mxu0 0.0
    %62 = vmatpush1.xpose.msra.mxu0 %v42
    %63 = vmatprep.subr.mxu0 0.0
    %64 = vmatpush1.xpose.msra.mxu0 %v41
    %65 = vmatprep.subr.mxu0 0.0
    %66 = vmatpush1.xpose.msra.mxu0 %v40
    %67 = vmatprep.subr.mxu0 0.0
    %68 = vmatpush1.xpose.msra.mxu0 %v39
    %69 = vmatprep.subr.mxu0 0.0
    %70 = vmatpush1.xpose.msra.mxu0 %v38
    %71 = vmatprep.subr.mxu0 0.0
    %72 = vmatpush1.xpose.msra.mxu0 %v37
    %73 = vmatprep.subr.mxu0 0.0
    %74 = vmatpush1.xpose.msra.mxu0 %v36
    %75 = vmatprep.subr.mxu0 0.0
    %76 = vmatpush1.xpose.msra.mxu0 %v35
    %77 = vmatprep.subr.mxu0 0.0
    %78 = vmatpush1.xpose.msra.mxu0 %v34
    %79 = vmatprep.subr.mxu0 0.0
    %80 = vmatpush1.xpose.msra.mxu0 %v33
    %81 = vmatprep.subr.mxu0 0.0
    %82 = vmatpush2.xpose.msra.mxu0 0.0
    %83 = vmatprep.subr.mxu0 0.0
    %84 = vmatpush2.xpose.msra.mxu0 0.0
    %85 = vmatprep.subr.mxu0 0.0
    %86 = vmatpush2.xpose.msra.mxu0 0.0
    %87 = vmatprep.subr.mxu0 0.0
    %88 = vmatpush2.xpose.msra.mxu0 0.0
    %89 = vmatprep.subr.mxu0 0.0
    %90 = vmatpush2.xpose.msra.mxu0 0.0
    %91 = vmatprep.subr.mxu0 0.0
    %92 = vmatpush2.xpose.msra.mxu0 0.0
    %93 = vmatprep.subr.mxu0 0.0
    %94 = vmatpush2.xpose.msra.mxu0 0.0
    %95 = vmatprep.subr.mxu0 0.0
    %96 = vmatpush2.xpose.msra.mxu0 0.0
    %97 = vmatprep.subr.mxu0 0.0
    %98 = vmatpush2.xpose.msra.mxu0 0.0
    %99 = vmatprep.subr.mxu0 0.0
    %100 = vmatpush2.xpose.msra.mxu0 0.0
    %101 = vmatprep.subr.mxu0 0.0
    %102 = vmatpush2.xpose.msra.mxu0 0.0
    %103 = vmatprep.subr.mxu0 0.0
    %104 = vmatpush2.xpose.msra.mxu0 0.0
    %105 = vmatprep.subr.mxu0 0.0
    %106 = vmatpush2.xpose.msra.mxu0 0.0
    %107 = vmatprep.subr.mxu0 0.0
    %108 = vmatpush2.xpose.msra.mxu0 0.0
    %109 = vmatprep.subr.mxu0 0.0
    %110 = vmatpush2.xpose.msra.mxu0 0.0
    %111 = vmatprep.subr.mxu0 0.0
    %112 = vmatpush2.xpose.msra.mxu0 0.0
    %113 = vmatprep.mubr.f32.mxu0 0.0
    %114 = vmatmul.mubr.f32.gmra.mxu0 %v32
    %v115 = vpop.f32.mrf.mxu0
    %v116 = vadd.f32 0.0, %v115
    %v117 = vpop.f32.mrf.mxu0
    %118 = vdwg.mxu0
    %v119 = vld [vmem:[%s2] sm:$0xff]
    %121 = vset.pattern.permute.xlu0 0
    %122 = vperm.xlu0 %121, %v119
    %v123 = vpop.permute.xlu0 %122
    %v125 = vmul.f32 %v116, %v123
    %v126 = vld [vmem:[%s3] sm:$0x1]
    %v128 = vlaneseq
    %v129 = vshrl.u32 %v128, 7
    %v130 = vsub.s32 0, %v129
    %v131 = vrot.slane %v126, %v130
    %v133 = vmul.f32 %v125, %v131
    %134 = vst [vmem:[#allocation5] sm:$0xff] %v133
    // Predicated region
    $region22: #{tpu_custom_call.1} parent=1 // pred_check
      _
    $region23: #{tpu_custom_call.1} parent=1 // pred_check_branch
      %136 = sbr.rel (0) target = $region25
    $region24: #{tpu_custom_call.1} parent=1 // pred_region
      %s138 = ssub.s32 128, 128
      %139 = vsyncadd [#allocation4], %s138
      %s141 = sshll.u32 [#allocation5], 4
      %s142 = int_to_ptr.vmem [resolvable:$true] %s141
      %144 = dma.vmem_to_hbm [thread:$0]  %s142, 128, %s4, [#allocation4]
    $region25: #{tpu_custom_call.1} parent=1 // pred_fallthru
      _
    // Predicated region
    $region26: #{tpu_custom_call.1} parent=1 // pred_check
      _
    $region27: #{tpu_custom_call.1} parent=1 // pred_check_branch
      %146 = sbr.rel (0) target = $region29
    $region28: #{tpu_custom_call.1} parent=1 // pred_region
      %147 = dma.done [#allocation4], 128
    $region29: #{tpu_custom_call.1} parent=1 // pred_fallthru
      _
    %148 = vsyncpa [#allocation3], 1
    %149 = vsyncpa [#allocation4], 1

</llo_original>
